<compile_context>
chip_gen: v7x
topology: tpu7x:2x2x1
jax: 0.10.0
libtpu: 0.0.40
codegen_flags: <defaults>
</compile_context>

<pallas_src>
import functools
import math

import numpy as np
import jax
import jax.numpy as jnp
from jax.experimental import pallas as pl
from jax.experimental.pallas import tpu as pltpu

# MXU operand dtype: bf16 is MXU-native on v5e/v6e/v7x.  Accumulation stays
# f32 (preferred_element_type) and LayerNorm / softmax stats stay f32, so the
# result differs from the f32 PyTorch reference only by bf16 rounding of the
# matmul inputs.  Set to jnp.float32 for closer numerical parity.
MXU_INPUT_DTYPE = jnp.bfloat16

# Scoped-VMEM limit for the fused layer kernels: well above the 16/32 MiB
# scoped defaults (v5e / v6e-v7x), still under v7x's 64 MiB physical VMEM.
VMEM_LIMIT_BYTES = 48 * 1024 * 1024


# --------------------------------------------------------------------------
# sin-cos positional embedding (exactly the reference numpy code)
# --------------------------------------------------------------------------
def get_1d_sincos_pos_embed_from_grid(embed_dim, pos):
    assert embed_dim % 2 == 0
    omega = np.arange(embed_dim // 2, dtype=np.float32)
    omega /= embed_dim / 2.0
    omega = 1.0 / 10000 ** omega
    pos = pos.reshape(-1)
    out = np.einsum('m,d->md', pos, omega)
    emb_sin = np.sin(out)
    emb_cos = np.cos(out)
    emb = np.concatenate([emb_sin, emb_cos], axis=1)
    return emb


def get_2d_sincos_pos_embed(embed_dim, grid_size):
    grid_h = np.arange(grid_size, dtype=np.float32)
    grid_w = np.arange(grid_size, dtype=np.float32)
    grid = np.meshgrid(grid_w, grid_h)
    grid = np.stack(grid, axis=0)
    grid = grid.reshape([2, 1, grid_size, grid_size])
    pos_embed = get_1d_sincos_pos_embed_from_grid(embed_dim, grid)
    return pos_embed


# --------------------------------------------------------------------------
# small helpers (used inside kernels)
# --------------------------------------------------------------------------
def _round_up(x, m):
    return ((x + m - 1) // m) * m


def _mm(a, b):
    """MXU matmul with f32 accumulation; operands cast to MXU_INPUT_DTYPE."""
    return jnp.dot(a.astype(MXU_INPUT_DTYPE), b.astype(MXU_INPUT_DTYPE),
                   preferred_element_type=jnp.float32)


def _ln(x, g, b, eps):
    mu = jnp.mean(x, axis=-1, keepdims=True)
    var = jnp.mean(jnp.square(x - mu), axis=-1, keepdims=True)
    return (x - mu) * jax.lax.rsqrt(var + eps) * g + b


def _heads(x, num_heads):
    """(L, D) -> (H, L, dh).  Heads are channel-packed, so this is a reshape
    of the lane dim plus one leading-batch transpose (once per tensor/layer,
    instead of H sub-lane column slices)."""
    L, D = x.shape
    dh = D // num_heads
    return jnp.transpose(x.reshape(L, num_heads, dh), (1, 0, 2))


def _mha(x_q, x_kv, wq, bq, wk, bk, wv, bv, wo, bo, num_heads):
    """Multi-head attention with heads batched into single dot_generals.

    Q/K/V: three full-contraction (L,D)x(D,D) matmuls (no slicing of a fused
    QKV result).  Scores and PV use leading-batch einsums over (H, L, dh).
    The out-projection is ONE (L,D)x(D,D) matmul after the heads are written
    back channel-packed.  Softmax stays f32; denominator uses the EUP
    approximate reciprocal.
    """
    Lq, D = x_q.shape
    dh = D // num_heads
    scale = 1.0 / math.sqrt(dh)

    q = _heads(_mm(x_q, wq) + bq, num_heads).astype(MXU_INPUT_DTYPE)    # (H,Lq,dh)
    k = _heads(_mm(x_kv, wk) + bk, num_heads).astype(MXU_INPUT_DTYPE)   # (H,Lk,dh)
    v = _heads(_mm(x_kv, wv) + bv, num_heads).astype(MXU_INPUT_DTYPE)   # (H,Lk,dh)

    s = jnp.einsum('hqd,hkd->hqk', q, k,
                   preferred_element_type=jnp.float32) * scale          # (H,Lq,Lk)
    m = jnp.max(s, axis=-1, keepdims=True)
    p = jnp.exp(s - m)
    p = p * pl.reciprocal(jnp.sum(p, axis=-1, keepdims=True), approx=True)
    o = jnp.einsum('hqk,hkd->hqd', p.astype(MXU_INPUT_DTYPE), v,
                   preferred_element_type=jnp.float32)                  # (H,Lq,dh)
    o = jnp.transpose(o, (1, 0, 2)).reshape(Lq, D)                      # concat heads
    return _mm(o, wo) + bo                                              # one out-proj


# --------------------------------------------------------------------------
# Pallas kernels
# --------------------------------------------------------------------------
def _matmul_bias_kernel(x_ref, w_ref, b_ref, o_ref, *, activation):
    y = _mm(x_ref[...], w_ref[...]) + b_ref[...]
    if activation == "relu":
        y = jnp.maximum(y, 0.0)
    o_ref[...] = y


def matmul_bias(x, lin, activation=None):
    """y = x @ w + b with a lane-dense (multiple-of-128) padded N.

    Weights / bias were padded and cast once in prepare_params; the only
    per-call padding is (rarely) the activation row count up to a sublane
    multiple of 8.  M/N tiled with a parallel grid; K kept whole (small here).
    """
    M, K = x.shape
    wp, bp, N = lin["w"], lin["b"], lin["n"]
    Np = wp.shape[1]
    bm = min(256, _round_up(M, 8))
    Mp = _round_up(M, bm)
    xp = x if Mp == M else jnp.pad(x, ((0, Mp - M), (0, 0)))
    if Np <= 512:
        bn = Np
    elif Np % 512 == 0:
        bn = 512
    elif Np % 256 == 0:
        bn = 256
    else:
        bn = 128
    out = pl.pallas_call(
        functools.partial(_matmul_bias_kernel, activation=activation),
        out_shape=jax.ShapeDtypeStruct((Mp, Np), jnp.float32),
        grid=(Mp // bm, Np // bn),
        in_specs=[
            pl.BlockSpec((bm, K), lambda i, j: (i, 0)),
            pl.BlockSpec((K, bn), lambda i, j: (0, j)),
            pl.BlockSpec((1, bn), lambda i, j: (0, j)),
        ],
        out_specs=pl.BlockSpec((bm, bn), lambda i, j: (i, j)),
        compiler_params=pltpu.CompilerParams(
            dimension_semantics=("parallel", "parallel")),
        cost_estimate=pl.CostEstimate(
            flops=2 * Mp * K * Np, transcendentals=0,
            bytes_accessed=4 * Mp * K + 2 * K * Np + 4 * Mp * Np),
    )(xp, wp, bp)
    return out[:M, :N] if (Mp != M or Np != N) else out


def _encoder_layer_kernel(x_ref, wq, bq, wk, bk, wv, bv, wo, bo,
                          g1, b1, w1, bm1, w2, bm2, g2, b2,
                          o_ref, *, num_heads, eps):
    # Whole nn.TransformerEncoderLayer (post-norm, ReLU, eval mode) fused.
    x = x_ref[0]                                              # (L, D)

    attn = _mha(x, x, wq[...], bq[...], wk[...], bk[...], wv[...], bv[...],
                wo[...], bo[...], num_heads)

    # residual + LayerNorm 1 (no HBM round trip)
    x = _ln(x + attn, g1[...], b1[...], eps)

    # fused MLP: lin1 + ReLU + lin2 (hidden stays on-chip)
    h = jnp.maximum(_mm(x, w1[...]) + bm1[...], 0.0)
    y = _mm(h, w2[...]) + bm2[...]

    # residual + LayerNorm 2
    o_ref[0] = _ln(x + y, g2[...], b2[...], eps)


def encoder_layer(x, p, num_heads, eps=1e-5):
    # TODO(synk): dropout (p=0.1) omitted; matches eval-mode semantics.
    B, L, D = x.shape
    a = p["attn"]
    F = p["lin1_w"].shape[1]
    inputs = [
        x,
        a["wq"], a["bq"], a["wk"], a["bk"], a["wv"], a["bv"], a["wo"], a["bo"],
        p["norm1_g"], p["norm1_b"],
        p["lin1_w"], p["lin1_b"], p["lin2_w"], p["lin2_b"],
        p["norm2_g"], p["norm2_b"],
    ]
    # Grid-invariant weights use a constant index_map: Pallas re-fetches them
    # only when the block index changes (i.e. once).  At real ViT scale,
    # additionally mark them pipeline_mode=pl.Buffered(1) to drop the
    # redundant second buffer and add a query-tile grid axis so both v7x
    # TensorCores / the DMA pipeline have >1 step of work per image.
    in_specs = [pl.BlockSpec((1, L, D), lambda b: (b, 0, 0))] + [
        pl.BlockSpec(t.shape, lambda b: (0, 0)) for t in inputs[1:]
    ]
    flops = B * (8 * L * D * D + 4 * L * L * D + 4 * L * D * F)
    bytes_acc = 8 * B * L * D + 2 * (4 * D * D + 2 * D * F) + 4 * (6 * D + F)
    return pl.pallas_call(
        functools.partial(_encoder_layer_kernel, num_heads=num_heads, eps=eps),
        out_shape=jax.ShapeDtypeStruct((B, L, D), jnp.float32),
        grid=(B,),
        in_specs=in_specs,
        out_specs=pl.BlockSpec((1, L, D), lambda b: (b, 0, 0)),
        compiler_params=pltpu.CompilerParams(
            dimension_semantics=("parallel",),
            vmem_limit_bytes=VMEM_LIMIT_BYTES),
        cost_estimate=pl.CostEstimate(flops=flops,
                                      transcendentals=B * num_heads * L * L,
                                      bytes_accessed=bytes_acc),
    )(*inputs)


def _decoder_layer_kernel(x_ref, mem_ref,
                          swq, sbq, swk, sbk, swv, sbv, swo, sbo, g1, b1,
                          cwq, cbq, cwk, cbk, cwv, cbv, cwo, cbo, g2, b2,
                          w1, bm1, w2, bm2, g3, b3,
                          o_ref, *, num_heads, eps):
    # Whole nn.TransformerDecoderLayer (post-norm, ReLU, no masks, eval) fused.
    x = x_ref[0]                                              # (L, D)
    mem = mem_ref[0]                                          # (Lm, D)

    # self-attention + residual + LN1
    sa = _mha(x, x, swq[...], sbq[...], swk[...], sbk[...], swv[...], sbv[...],
              swo[...], sbo[...], num_heads)
    x = _ln(x + sa, g1[...], b1[...], eps)

    # cross-attention (q from x, k/v from memory) + residual + LN2
    ca = _mha(x, mem, cwq[...], cbq[...], cwk[...], cbk[...], cwv[...], cbv[...],
              cwo[...], cbo[...], num_heads)
    x = _ln(x + ca, g2[...], b2[...], eps)

    # fused MLP + residual + LN3
    h = jnp.maximum(_mm(x, w1[...]) + bm1[...], 0.0)
    y = _mm(h, w2[...]) + bm2[...]
    o_ref[0] = _ln(x + y, g3[...], b3[...], eps)


def decoder_layer(x, mem, p, num_heads, eps=1e-5):
    B, L, D = x.shape
    Lm = mem.shape[1]
    sa, ca = p["self_attn"], p["cross_attn"]
    F = p["lin1_w"].shape[1]
    inputs = [
        x, mem,
        sa["wq"], sa["bq"], sa["wk"], sa["bk"], sa["wv"], sa["bv"], sa["wo"], sa["bo"],
        p["norm1_g"], p["norm1_b"],
        ca["wq"], ca["bq"], ca["wk"], ca["bk"], ca["wv"], ca["bv"], ca["wo"], ca["bo"],
        p["norm2_g"], p["norm2_b"],
        p["lin1_w"], p["lin1_b"], p["lin2_w"], p["lin2_b"],
        p["norm3_g"], p["norm3_b"],
    ]
    in_specs = [pl.BlockSpec((1, L, D), lambda b: (b, 0, 0)),
                pl.BlockSpec((1, Lm, D), lambda b: (b, 0, 0))] + [
        pl.BlockSpec(t.shape, lambda b: (0, 0)) for t in inputs[2:]
    ]
    flops = B * (8 * L * D * D + 4 * L * L * D
                 + 4 * L * D * D + 4 * Lm * D * D + 4 * L * Lm * D
                 + 4 * L * D * F)
    bytes_acc = 8 * B * L * D + 4 * B * Lm * D + 2 * (8 * D * D + 2 * D * F) \
        + 4 * (10 * D + F)
    return pl.pallas_call(
        functools.partial(_decoder_layer_kernel, num_heads=num_heads, eps=eps),
        out_shape=jax.ShapeDtypeStruct((B, L, D), jnp.float32),
        grid=(B,),
        in_specs=in_specs,
        out_specs=pl.BlockSpec((1, L, D), lambda b: (b, 0, 0)),
        compiler_params=pltpu.CompilerParams(
            dimension_semantics=("parallel",),
            vmem_limit_bytes=VMEM_LIMIT_BYTES),
        cost_estimate=pl.CostEstimate(
            flops=flops,
            transcendentals=B * num_heads * L * (L + Lm),
            bytes_accessed=bytes_acc),
    )(*inputs)


def _pool_fc_kernel(x_ref, w_ref, b_ref, o_ref):
    pooled = jnp.mean(x_ref[0], axis=0, keepdims=True)        # (1, D)
    o_ref[...] = _mm(pooled, w_ref[...]) + b_ref[...]


def mean_pool_fc(x, lin):
    """Fused mean-over-tokens + linear head, gridded over batch.

    One (1, L, D) block per grid step (scales with B*L*D and pipelines);
    output lane-padded to a multiple of 128, logits sliced back afterwards.
    """
    B, L, D = x.shape
    wp, bp, N = lin["w"], lin["b"], lin["n"]
    Np = wp.shape[1]
    out = pl.pallas_call(
        _pool_fc_kernel,
        out_shape=jax.ShapeDtypeStruct((B, Np), jnp.float32),
        grid=(B,),
        in_specs=[pl.BlockSpec((1, L, D), lambda b: (b, 0, 0)),
                  pl.BlockSpec(wp.shape, lambda b: (0, 0)),
                  pl.BlockSpec(bp.shape, lambda b: (0, 0))],
        out_specs=pl.BlockSpec((1, Np), lambda b: (b, 0)),
        compiler_params=pltpu.CompilerParams(dimension_semantics=("parallel",)),
        cost_estimate=pl.CostEstimate(
            flops=2 * B * D * Np + B * L * D, transcendentals=0,
            bytes_accessed=4 * B * L * D + 2 * D * Np + 4 * B * Np),
    )(x, wp, bp)
    return out[:, :N]


# --------------------------------------------------------------------------
# Model pieces built from kernels
# --------------------------------------------------------------------------
def patch_embed_fn(x, lin, patch_size):
    """Conv2d(k=p, stride=p) as patch-extraction + matmul.  x:(B,C,H,W)."""
    B, C, H, W = x.shape
    p = patch_size
    gh, gw = H // p, W // p
    patches = (
        x.reshape(B, C, gh, p, gw, p)
        .transpose(0, 2, 4, 1, 3, 5)
        .reshape(B * gh * gw, C * p * p)
    )
    out = matmul_bias(patches, lin)
    return out.reshape(B, gh * gw, lin["n"])


def random_masking(x, mask_ratio, key):
    N, L, D = x.shape
    len_keep = int(L * (1 - mask_ratio))
    noise = jax.random.uniform(key, (N, L))
    ids_shuffle = jnp.argsort(noise, axis=1)
    ids_restore = jnp.argsort(ids_shuffle, axis=1)
    ids_keep = ids_shuffle[:, :len_keep]
    x_masked = jnp.take_along_axis(x, ids_keep[:, :, None], axis=1)
    mask = jnp.ones((N, L), dtype=jnp.float32)
    mask = mask.at[:, :len_keep].set(0.0)
    mask = jnp.take_along_axis(mask, ids_restore, axis=1)
    return x_masked, mask, ids_restore


def forward_encoder(params, cfg, x, mask_ratio, key):
    x = patch_embed_fn(x, params["patch_embed"], cfg["patch_size"])
    x = x + params["pos_embed"]
    x, mask, ids_restore = random_masking(x, mask_ratio, key)
    for lp in params["encoder_layers"]:
        x = encoder_layer(x, lp, cfg["num_heads"])
    return x, mask, ids_restore


def forward_decoder(params, cfg, x, ids_restore):
    B, Lk, D = x.shape
    Dd = cfg["decoder_embed_dim"]
    x = matmul_bias(x.reshape(B * Lk, D), params["decoder_embed"]).reshape(B, Lk, Dd)
    L = ids_restore.shape[1]
    # TODO(synk): reference builds mask tokens via zeros_like(x[:,:1,:]).repeat(B,...)
    # (shape quirk for B>1); zeros of shape (B, L-Lk, Dd) is the sensible reading.
    mask_tokens = jnp.zeros((B, L - Lk, Dd), jnp.float32)
    x_ = jnp.concatenate([x, mask_tokens], axis=1)
    x = jnp.take_along_axis(x_, ids_restore[:, :, None], axis=1)
    mem = x  # decoder(x, x): memory is the gathered sequence, fixed across layers
    for lp in params["decoder_layers"]:
        x = decoder_layer(x, mem, lp, cfg["decoder_num_heads"])
    x = matmul_bias(x.reshape(B * L, Dd), params["decoder_pred"])
    return x.reshape(B, L, -1)


def forward_classification(params, cfg, x):
    x = patch_embed_fn(x, params["patch_embed"], cfg["patch_size"])
    x = x + params["pos_embed"]
    for lp in params["encoder_layers"]:
        x = encoder_layer(x, lp, cfg["num_heads"])
    return mean_pool_fc(x, params["fc"])


def forward(params, cfg, x, mask_key, mask_ratio=None, is_train=True):
    if is_train and mask_ratio is not None:
        latent, mask, ids_restore = forward_encoder(params, cfg, x, mask_ratio, mask_key)
        pred = forward_decoder(params, cfg, latent, ids_restore)
        return pred, mask
    else:
        return forward_classification(params, cfg, x)


# --------------------------------------------------------------------------
# Deterministic parameter init (shapes from MAEViT.__init__) + one-time prep
# --------------------------------------------------------------------------
def init_params(key, cfg):
    D, Dd = cfg["embed_dim"], cfg["decoder_embed_dim"]
    C, p = cfg["in_chans"], cfg["patch_size"]
    ff, ffd = int(D * cfg["mlp_ratio"]), int(Dd * cfg["mlp_ratio"])
    num_patches = (cfg["img_size"] // p) ** 2

    keys = iter(jax.random.split(key, 512))
    nk = lambda: next(keys)
    W = lambda *s: 0.02 * jax.random.normal(nk(), s, jnp.float32)

    def attn_p(dim):
        return {
            "in_proj_w": W(dim, 3 * dim), "in_proj_b": jnp.zeros((3 * dim,), jnp.float32),
            "out_w": W(dim, dim), "out_b": jnp.zeros((dim,), jnp.float32),
        }

    def enc_layer_p():
        return {
            "attn": attn_p(D),
            "lin1_w": W(D, ff), "lin1_b": jnp.zeros((ff,), jnp.float32),
            "lin2_w": W(ff, D), "lin2_b": jnp.zeros((D,), jnp.float32),
            "norm1_g": jnp.ones((D,), jnp.float32), "norm1_b": jnp.zeros((D,), jnp.float32),
            "norm2_g": jnp.ones((D,), jnp.float32), "norm2_b": jnp.zeros((D,), jnp.float32),
        }

    def dec_layer_p():
        return {
            "self_attn": attn_p(Dd), "cross_attn": attn_p(Dd),
            "lin1_w": W(Dd, ffd), "lin1_b": jnp.zeros((ffd,), jnp.float32),
            "lin2_w": W(ffd, Dd), "lin2_b": jnp.zeros((Dd,), jnp.float32),
            "norm1_g": jnp.ones((Dd,), jnp.float32), "norm1_b": jnp.zeros((Dd,), jnp.float32),
            "norm2_g": jnp.ones((Dd,), jnp.float32), "norm2_b": jnp.zeros((Dd,), jnp.float32),
            "norm3_g": jnp.ones((Dd,), jnp.float32), "norm3_b": jnp.zeros((Dd,), jnp.float32),
        }

    grid_size = int(num_patches ** 0.5)
    pe = get_2d_sincos_pos_embed(D, grid_size)  # (2*gs*gs, D)
    # TODO(synk): reference .copy_() has a row-count mismatch (2*gs*gs vs gs*gs);
    # truncate to num_patches rows to get a well-defined (1, L, D) pos_embed.
    pos_embed = jnp.asarray(pe[:num_patches], jnp.float32)[None]

    return {
        "patch_embed": {"w": W(D, C, p, p), "b": jnp.zeros((D,), jnp.float32)},
        "pos_embed": pos_embed,
        "encoder_layers": [enc_layer_p() for _ in range(cfg["depth"])],
        "decoder_embed": {"w": W(D, Dd), "b": jnp.zeros((Dd,), jnp.float32)},
        "decoder_layers": [dec_layer_p() for _ in range(cfg["decoder_depth"])],
        "decoder_pred": {"w": W(Dd, p * p * C), "b": jnp.zeros((p * p * C,), jnp.float32)},
        "fc": {"w": W(D, cfg["num_classes"]), "b": jnp.zeros((cfg["num_classes"],), jnp.float32)},
    }


def _prep_linear(w, b):
    """Pad N to a lane multiple of 128 and cast to MXU dtype (done ONCE)."""
    K, N = w.shape
    Np = _round_up(max(N, 128), 128)
    wp = w if Np == N else jnp.pad(w, ((0, 0), (0, Np - N)))
    bp = b if Np == N else jnp.pad(b, ((0, Np - N),))
    return {"w": wp.astype(MXU_INPUT_DTYPE),
            "b": bp.reshape(1, Np).astype(jnp.float32),
            "n": N}


def _prep_attn(a, dim):
    """Split the fused in_proj into q/k/v weights (host side, once) so the
    kernel never column-slices the qkv result; cast matmul weights to bf16."""
    w, b = a["in_proj_w"], a["in_proj_b"]
    cast = lambda t: t.astype(MXU_INPUT_DTYPE)
    row = lambda t: t.reshape(1, dim).astype(jnp.float32)
    return {"wq": cast(w[:, :dim]), "wk": cast(w[:, dim:2 * dim]), "wv": cast(w[:, 2 * dim:]),
            "bq": row(b[:dim]), "bk": row(b[dim:2 * dim]), "bv": row(b[2 * dim:]),
            "wo": cast(a["out_w"]), "bo": row(a["out_b"])}


def _prep_ln(g, b, dim):
    return g.reshape(1, dim).astype(jnp.float32), b.reshape(1, dim).astype(jnp.float32)


def _prep_enc_layer(p, dim):
    F = p["lin1_w"].shape[1]
    g1, b1 = _prep_ln(p["norm1_g"], p["norm1_b"], dim)
    g2, b2 = _prep_ln(p["norm2_g"], p["norm2_b"], dim)
    return {"attn": _prep_attn(p["attn"], dim),
            "norm1_g": g1, "norm1_b": b1,
            "lin1_w": p["lin1_w"].astype(MXU_INPUT_DTYPE),
            "lin1_b": p["lin1_b"].reshape(1, F).astype(jnp.float32),
            "lin2_w": p["lin2_w"].astype(MXU_INPUT_DTYPE),
            "lin2_b": p["lin2_b"].reshape(1, dim).astype(jnp.float32),
            "norm2_g": g2, "norm2_b": b2}


def _prep_dec_layer(p, dim):
    F = p["lin1_w"].shape[1]
    out = {"self_attn": _prep_attn(p["self_attn"], dim),
           "cross_attn": _prep_attn(p["cross_attn"], dim),
           "lin1_w": p["lin1_w"].astype(MXU_INPUT_DTYPE),
           "lin1_b": p["lin1_b"].reshape(1, F).astype(jnp.float32),
           "lin2_w": p["lin2_w"].astype(MXU_INPUT_DTYPE),
           "lin2_b": p["lin2_b"].reshape(1, dim).astype(jnp.float32)}
    for i in (1, 2, 3):
        g, b = _prep_ln(p["norm%d_g" % i], p["norm%d_b" % i], dim)
        out["norm%d_g" % i], out["norm%d_b" % i] = g, b
    return out


def prepare_params(params, cfg):
    """One-time, host-side weight preparation (pad / split / reshape / bf16-cast)."""
    D, Dd = cfg["embed_dim"], cfg["decoder_embed_dim"]
    C, p = cfg["in_chans"], cfg["patch_size"]
    pe_w = params["patch_embed"]["w"].reshape(D, C * p * p).T     # (C*p*p, D)
    return {
        "patch_embed": _prep_linear(pe_w, params["patch_embed"]["b"]),
        "pos_embed": params["pos_embed"],
        "encoder_layers": [_prep_enc_layer(lp, D) for lp in params["encoder_layers"]],
        "decoder_embed": _prep_linear(params["decoder_embed"]["w"], params["decoder_embed"]["b"]),
        "decoder_layers": [_prep_dec_layer(lp, Dd) for lp in params["decoder_layers"]],
        "decoder_pred": _prep_linear(params["decoder_pred"]["w"], params["decoder_pred"]["b"]),
        "fc": _prep_linear(params["fc"]["w"], params["fc"]["b"]),
    }


# --------------------------------------------------------------------------
if __name__ == "__main__":
    cfg = dict(
        img_size=16, patch_size=4, in_chans=4, embed_dim=32, depth=2, num_heads=4,
        decoder_embed_dim=32, decoder_depth=2, decoder_num_heads=4,
        mlp_ratio=4.0, mask_ratio=0.75, num_classes=7,
    )
    key = jax.random.PRNGKey(0)
    pkey, xkey, mkey = jax.random.split(key, 3)

    params = prepare_params(init_params(pkey, cfg), cfg)
    x = jax.random.normal(xkey, (2, cfg["in_chans"], cfg["img_size"], cfg["img_size"]),
                          jnp.float32)

    # MAE training path: (pred, mask)
    pred, mask = forward(params, cfg, x, mkey, mask_ratio=cfg["mask_ratio"], is_train=True)
    # Classification path
    logits = forward(params, cfg, x, mkey, mask_ratio=None, is_train=False)

    jax.block_until_ready((pred, mask, logits))

    num_patches = (cfg["img_size"] // cfg["patch_size"]) ** 2
    assert pred.shape == (2, num_patches, cfg["patch_size"] ** 2 * cfg["in_chans"])
    assert mask.shape == (2, num_patches)
    assert logits.shape == (2, cfg["num_classes"])
    assert jnp.all(jnp.isfinite(pred)) and jnp.all(jnp.isfinite(logits))
    print("KERNEL_OK")
</pallas_src>

<mosaic_0001>
module attributes {stable_mosaic.version = 11 : i64} {
  func.func @_matmul_bias_kernel(%arg0: i32, %arg1: i32, %arg2: memref<32x64xf32, #tpu.memory_space<vmem>>, %arg3: memref<64x128xbf16, #tpu.memory_space<vmem>>, %arg4: memref<1x128xf32, #tpu.memory_space<vmem>>, %arg5: memref<32x128xf32, #tpu.memory_space<vmem>>) attributes {dimension_semantics = [#tpu.dimension_semantics<parallel>, #tpu.dimension_semantics<parallel>], iteration_bounds = array<i64: 1, 1>, scalar_prefetch = 0 : i64, scratch_operands = 0 : i64, tpu.core_type = #tpu.core_type<tc>, window_params = [{transform_indices = @transform_0, window_bounds = array<i64: 32, 64>}, {transform_indices = @transform_1, window_bounds = array<i64: 64, 128>}, {transform_indices = @transform_2, window_bounds = array<i64: 1, 128>}, {transform_indices = @transform_3, window_bounds = array<i64: 32, 128>}]} {
    %c0 = arith.constant 0 : index
    %c0_0 = arith.constant 0 : index
    %0 = vector.load %arg2[%c0, %c0_0] : memref<32x64xf32, #tpu.memory_space<vmem>>, vector<32x64xf32>
    %c0_1 = arith.constant 0 : index
    %c0_2 = arith.constant 0 : index
    %1 = vector.load %arg3[%c0_1, %c0_2] : memref<64x128xbf16, #tpu.memory_space<vmem>>, vector<64x128xbf16>
    %2 = arith.truncf %0 : vector<32x64xf32> to vector<32x64xbf16>
    %cst = arith.constant dense<0.000000e+00> : vector<32x128xf32>
    %3 = tpu.matmul %2, %1, %cst {dimension_numbers = #tpu.dot_dimension_numbers<[1], [0], [0], [1], [0, 0, 1, 1], [], []>} : vector<32x64xbf16>, vector<64x128xbf16>, vector<32x128xf32> -> vector<32x128xf32>
    %c0_3 = arith.constant 0 : index
    %c0_4 = arith.constant 0 : index
    %4 = vector.load %arg4[%c0_3, %c0_4] : memref<1x128xf32, #tpu.memory_space<vmem>>, vector<1x128xf32>
    %5 = vector.broadcast %4 : vector<1x128xf32> to vector<32x128xf32>
    %6 = arith.addf %3, %5 : vector<32x128xf32>
    %c0_5 = arith.constant 0 : index
    %c0_6 = arith.constant 0 : index
    %7 = vector.load %arg5[%c0_5, %c0_6] : memref<32x128xf32, #tpu.memory_space<vmem>>, vector<32x128xf32>
    tpu.vector_store %arg5[%c0_5, %c0_6], %6 {strides = array<i32>} : memref<32x128xf32, #tpu.memory_space<vmem>>, vector<32x128xf32>,
    return
  }
  func.func @transform_0(%arg0: i32, %arg1: i32) -> (i32, i32) {
    %c0_i32 = arith.constant 0 : i32
    %c0_i32_0 = arith.constant 0 : i32
    return %arg0, %c0_i32 : i32, i32
  }
  func.func @transform_1(%arg0: i32, %arg1: i32) -> (i32, i32) {
    %c0_i32 = arith.constant 0 : i32
    %c0_i32_0 = arith.constant 0 : i32
    return %c0_i32, %arg1 : i32, i32
  }
  func.func @transform_2(%arg0: i32, %arg1: i32) -> (i32, i32) {
    %c0_i32 = arith.constant 0 : i32
    %c0_i32_0 = arith.constant 0 : i32
    return %c0_i32, %arg1 : i32, i32
  }
  func.func @transform_3(%arg0: i32, %arg1: i32) -> (i32, i32) {
    %c0_i32 = arith.constant 0 : i32
    return %arg0, %arg1 : i32, i32
  }
}

</mosaic_0001>

<llo_original>
// kernel: tpu_custom_call.1
$region0: #{tpu_custom_call.1}
  #allocation0 [shape = 'u32[]', space=smem, size = 0x4, offset = 0x4, fixed_abs, tag = 'smem constant byte address 0x4 - core index']
  #allocation1 [shape = 'u32[144,128]{1,0:T(1,128)}', space=vmem, size = 0x12000, scoped, tag = 'internal scratch']
  %s0 = inlined_call_operand.hbm [shape: f32[32,64], index: 0, kind: input, shape index: {}]
  %s1 = inlined_call_operand.hbm [shape: bf16[64,128], index: 1, kind: input, shape index: {}]
  %s2 = inlined_call_operand.vmem [shape: f32[1,128], index: 2, kind: input, shape index: {}]
  %s3 = inlined_call_operand.hbm [shape: f32[32,128], index: 3, kind: output, shape index: {}]
  %s4 = sld [smem:[#allocation0]]
  $region30: #{tpu_custom_call.1} parent=0
    _
  %s6 = ssub.s32 1, %s4
  %s7 = scalar_select 0, %s6, %s4
  $region1: #{tpu_custom_call.1} parent=0
    #allocation2 [shape = 'u8[16384]{0}', space=vmem, size = 0x4000, scoped, tag = 'input window, operand 0, single buffered']
    #allocation3 [shape = 's32[1]{0}', space=sflag, size = 0x4, scoped, tag = 'scoped memory for tpu_custom_call.1']
    #allocation4 [shape = 's32[1]{0}', space=sflag, size = 0x4, scoped, tag = 'scoped memory for tpu_custom_call.1']
    #allocation5 [shape = 'u8[16384]{0}', space=vmem, size = 0x4000, scoped, tag = 'input window, operand 1, single buffered']
    #allocation6 [shape = 's32[1]{0}', space=sflag, size = 0x4, scoped, tag = 'scoped memory for tpu_custom_call.1']
    #allocation7 [shape = 'u8[16384]{0}', space=vmem, size = 0x4000, scoped, tag = 'output window, operand 0, single buffered']
    %8 = vsyncpa [#allocation3], 0
    %9 = vsyncpa [#allocation6], 0
    %10 = vsyncpa [#allocation4], 0
    // Predicated region
    $region2: #{tpu_custom_call.1} parent=1 // pred_check
      _
    $region3: #{tpu_custom_call.1} parent=1 // pred_check_branch
      %12 = sbr.rel (0) target = $region5
    $region4: #{tpu_custom_call.1} parent=1 // pred_region
      %s14 = ssub.s32 512, 512
      %15 = vsyncadd [#allocation3], %s14
      %s16 = sshll.u32 [#allocation2], 4
      %s17 = int_to_ptr.vmem [resolvable:$true] %s16
      %22 = dma.hbm_to_vmem [thread:$0]  %s0, 512, %s17, [#allocation3], 128, 128, 8
    $region5: #{tpu_custom_call.1} parent=1 // pred_fallthru
      _
    // Predicated region
    $region6: #{tpu_custom_call.1} parent=1 // pred_check
      _
    $region7: #{tpu_custom_call.1} parent=1 // pred_check_branch
      %24 = sbr.rel (0) target = $region9
    $region8: #{tpu_custom_call.1} parent=1 // pred_region
      %s26 = ssub.s32 512, 512
      %27 = vsyncadd [#allocation6], %s26
      %s28 = sshll.u32 [#allocation5], 4
      %s29 = int_to_ptr.vmem [resolvable:$true] %s28
      %34 = dma.hbm_to_vmem [thread:$0]  %s1, 512, %s29, [#allocation6], 64, 64, 4
    $region9: #{tpu_custom_call.1} parent=1 // pred_fallthru
      _
    // Predicated region
    $region10: #{tpu_custom_call.1} parent=1 // pred_check
      _
    $region11: #{tpu_custom_call.1} parent=1 // pred_check_branch
      %36 = sbr.rel (0) target = $region13
    $region12: #{tpu_custom_call.1} parent=1 // pred_region
      _
    $region13: #{tpu_custom_call.1} parent=1 // pred_fallthru
      _
    // Predicated region
    $region14: #{tpu_custom_call.1} parent=1 // pred_check
      _
    $region15: #{tpu_custom_call.1} parent=1 // pred_check_branch
      %38 = sbr.rel (0) target = $region17
    $region16: #{tpu_custom_call.1} parent=1 // pred_region
      %39 = dma.done [#allocation3], 512
    $region17: #{tpu_custom_call.1} parent=1 // pred_fallthru
      _
    // Predicated region
    $region18: #{tpu_custom_call.1} parent=1 // pred_check
      _
    $region19: #{tpu_custom_call.1} parent=1 // pred_check_branch
      %41 = sbr.rel (0) target = $region21
    $region20: #{tpu_custom_call.1} parent=1 // pred_region
      %42 = dma.done [#allocation6], 512
    $region21: #{tpu_custom_call.1} parent=1 // pred_fallthru
      _
    %v44 = vld [vmem:[#allocation2] sm:$0xff]
    %v45 = vld [vmem:[#allocation2 + $0x8] sm:$0xff]
    %v46 = vld [vmem:[#allocation2 + $0x10] sm:$0xff]
    %v47 = vld [vmem:[#allocation2 + $0x18] sm:$0xff]
    %v48 = vld [vmem:[#allocation5] sm:$0xf]
    %v49 = vld [vmem:[#allocation5 + $0x4] sm:$0xf]
    %v50 = vld [vmem:[#allocation5 + $0x8] sm:$0xf]
    %v51 = vld [vmem:[#allocation5 + $0xc] sm:$0xf]
    %v52 = vld [vmem:[#allocation5 + $0x10] sm:$0xf]
    %v53 = vld [vmem:[#allocation5 + $0x14] sm:$0xf]
    %v54 = vld [vmem:[#allocation5 + $0x18] sm:$0xf]
    %v55 = vld [vmem:[#allocation5 + $0x1c] sm:$0xf]
    %v56 = vpack.c.bf16 %v45, %v44
    %v57 = vpack.c.bf16 %v47, %v46
    %v58 = vld [vmem:[%s2] sm:$0x1]
    %v60 = vlaneseq
    %v61 = vshrl.u32 %v60, 7
    %v62 = vsub.s32 0, %v61
    %v63 = vrot.slane %v58, %v62
    %v73 = vunpack.c.l.b16 %v48
    %v74 = vunpack.c.l.b16 %v49
    %v75 = vunpack.c.l.b16 %v50
    %v76 = vunpack.c.l.b16 %v51
    %v77 = vunpack.c.l.b16 %v52
    %v78 = vunpack.c.l.b16 %v53
    %v79 = vunpack.c.l.b16 %v54
    %v80 = vunpack.c.l.b16 %v55
    %v81 = vpack.c.b16 %v74, %v73
    %v82 = vpack.c.b16 %v76, %v75
    %v83 = vpack.c.b16 %v78, %v77
    %v84 = vpack.c.b16 %v80, %v79
    %vm89 = vcmask 523264
    %v91 = vsel %vm89, %v56, 0
    %v94 = vsel %vm89, %v57, 0
    %96 = vmatprep.subr.bf16.mxu0 0
    %97 = vmatpush1.bf16.msra.mxu0 %v81
    %98 = vmatprep.subr.bf16.mxu0 0
    %99 = vmatpush1.bf16.msra.mxu0 %v82
    %100 = vmatprep.subr.bf16.mxu0 0
    %101 = vmatpush1.bf16.msra.mxu0 %v83
    %102 = vmatprep.subr.bf16.mxu0 0
    %103 = vmatpush1.bf16.msra.mxu0 %v84
    %104 = vmatprep.subr.bf16.mxu0 0
    %105 = vmatpush1.bf16.msra.mxu0 0
    %106 = vmatprep.subr.bf16.mxu0 0
    %107 = vmatpush1.bf16.msra.mxu0 0
    %108 = vmatprep.subr.bf16.mxu0 0
    %109 = vmatpush1.bf16.msra.mxu0 0
    %110 = vmatprep.subr.bf16.mxu0 0
    %111 = vmatpush1.bf16.msra.mxu0 0
    %112 = vmatprep.subr.bf16.mxu0 0
    %113 = vmatpush1.bf16.msra.mxu0 0
    %114 = vmatprep.subr.bf16.mxu0 0
    %115 = vmatpush1.bf16.msra.mxu0 0
    %116 = vmatprep.subr.bf16.mxu0 0
    %117 = vmatpush1.bf16.msra.mxu0 0
    %118 = vmatprep.subr.bf16.mxu0 0
    %119 = vmatpush1.bf16.msra.mxu0 0
    %120 = vmatprep.subr.bf16.mxu0 0
    %121 = vmatpush1.bf16.msra.mxu0 0
    %122 = vmatprep.subr.bf16.mxu0 0
    %123 = vmatpush1.bf16.msra.mxu0 0
    %124 = vmatprep.subr.bf16.mxu0 0
    %125 = vmatpush1.bf16.msra.mxu0 0
    %126 = vmatprep.subr.bf16.mxu0 0
    %127 = vmatpush1.bf16.msra.mxu0 0
    %128 = vmatprep.mubr.bf16.mxu0 0
    %129 = vmatmul.mubr.bf16.gmra.mrb[0].mxu0 %v91
    %v130 = vpop.f32.mrb[0].mxu0
    %v131 = vadd.f32 %v63, %v130
    %v132 = vpop.f32.mrb[0].mxu0
    %v133 = vpop.f32.mrb[0].mxu0
    %v134 = vadd.f32 %v63, %v133
    %v135 = vpop.f32.mrb[0].mxu0
    %136 = vmatprep.mubr.bf16.mxu0 0
    %137 = vmatmul.mubr.bf16.gmra.mrb[0].mxu0 %v94
    %v138 = vpop.f32.mrb[0].mxu0
    %v139 = vadd.f32 %v63, %v138
    %v140 = vpop.f32.mrb[0].mxu0
    %v141 = vpop.f32.mrb[0].mxu0
    %v142 = vadd.f32 %v63, %v141
    %v143 = vpop.f32.mrb[0].mxu0
    %144 = vdwg.mxu0
    %145 = vst [vmem:[#allocation7] sm:$0xff] %v131
    %146 = vst [vmem:[#allocation7 + $0x8] sm:$0xff] %v134
    %147 = vst [vmem:[#allocation7 + $0x10] sm:$0xff] %v139
    %148 = vst [vmem:[#allocation7 + $0x18] sm:$0xff] %v142
    // Predicated region
    $region22: #{tpu_custom_call.1} parent=1 // pred_check
      _
    $region23: #{tpu_custom_call.1} parent=1 // pred_check_branch
      %150 = sbr.rel (0) target = $region25
    $region24: #{tpu_custom_call.1} parent=1 // pred_region
      %s152 = ssub.s32 512, 512
      %153 = vsyncadd [#allocation4], %s152
      %s154 = sshll.u32 [#allocation7], 4
      %s155 = int_to_ptr.vmem [resolvable:$true] %s154
      %160 = dma.vmem_to_hbm [thread:$0]  %s155, 512, %s3, [#allocation4], 128, 128, 8
    $region25: #{tpu_custom_call.1} parent=1 // pred_fallthru
      _
    // Predicated region
    $region26: #{tpu_custom_call.1} parent=1 // pred_check
      _
    $region27: #{tpu_custom_call.1} parent=1 // pred_check_branch
      %162 = sbr.rel (0) target = $region29
    $region28: #{tpu_custom_call.1} parent=1 // pred_region
      %163 = dma.done [#allocation4], 512
    $region29: #{tpu_custom_call.1} parent=1 // pred_fallthru
      _
    %164 = vsyncpa [#allocation3], 1
    %165 = vsyncpa [#allocation6], 1
    %166 = vsyncpa [#allocation4], 1

</llo_original>
